<compile_context>
chip_gen: v7x
topology: tpu7x:2x2x1
jax: 0.10.0
libtpu: 0.0.40
codegen_flags: <defaults>
</compile_context>

<pallas_src>
import jax
import jax.numpy as jnp
from jax import lax
from jax.experimental import pallas as pl
from jax.experimental.pallas import tpu as pltpu

EPS = 1e-5
IN_DIM = 12
HID = 64
OUT_DIM = 1

_LANE = 128        # batch tiles stay lane-aligned
_MAX_TILE = 4096   # ~9 MiB VMEM footprint incl. double buffers -> fits all gens


def _mlp_kernel(x_ref, w1_ref, w2_ref, wo_ref, b_ref, o_ref):
    """One batch tile, batch on lanes: 3 MXU matmuls (bf16 in, f32 acc) + f32 ReLUs."""
    x = x_ref[...].astype(jnp.bfloat16)          # (tile, IN_DIM), cast in-kernel

    b = b_ref[...]                               # (HID, 3) f32, packed columns
    b1 = b[:, 0:1]                               # (HID, 1) layer_1 bias
    b2 = b[:, 1:2]                               # (HID, 1) layer_2 bias (BN1 folded)
    bo = b[0:1, 2:3]                             # (1, 1)   layer_out bias (BN2 folded)

    # h1T = W1 . xT : contract the feature dim of BOTH operands (q.kT form),
    # so x never needs an explicit transpose.
    h = lax.dot_general(
        w1_ref[...], x,
        dimension_numbers=(((1,), (1,)), ((), ())),
        preferred_element_type=jnp.float32)      # (HID, tile)
    h = jnp.maximum(h + b1, 0.0)                 # f32 elementwise (v5e-safe)

    h = jnp.dot(w2_ref[...], h.astype(jnp.bfloat16),
                preferred_element_type=jnp.float32)   # (HID, tile)
    h = jnp.maximum(h + b2, 0.0)

    # dropout: identity in eval mode
    o_ref[...] = jnp.dot(wo_ref[...], h.astype(jnp.bfloat16),
                         preferred_element_type=jnp.float32) + bo  # (1, tile)


def _round_up(x, m):
    return (x + m - 1) // m * m


def _pick_batch_tile(n):
    """Largest 128-aligned tile <= _MAX_TILE giving an even, balanced step
    count (2k steps) so both v7x TensorCores get equal work; single step for
    tiny batches."""
    if n <= _LANE:
        return _LANE
    k = 1
    while True:
        tile = _round_up(-(-n // (2 * k)), _LANE)
        if tile <= _MAX_TILE:
            return tile
        k += 1


def fold_batchnorm(params):
    """Fold the two eval-mode BatchNorms into the following Linear layers.

    Weights are in PyTorch (out, in) layout.  Returns bf16 weights
    (W1, W2', Wo') and a packed (HID, 3) f32 bias array:
      col 0 = b1, col 1 = b2', col 2[0] = bo'.
    """
    (w1, b1, g1, be1, m1, v1, w2, b2, g2, be2, m2, v2, wo, bo) = [
        p.astype(jnp.float32) for p in params
    ]
    s1 = g1 / jnp.sqrt(v1 + EPS)
    t1 = be1 - m1 * s1
    w2_f = w2 * s1[None, :]                     # (HID, HID)   scale input columns
    b2_f = b2 + w2 @ t1                         # (HID,)

    s2 = g2 / jnp.sqrt(v2 + EPS)
    t2 = be2 - m2 * s2
    wo_f = wo * s2[None, :]                     # (OUT_DIM, HID)
    bo_f = bo + wo @ t2                         # (OUT_DIM,)

    biases = jnp.zeros((HID, 3), jnp.float32)
    biases = biases.at[:, 0].set(b1)
    biases = biases.at[:, 1].set(b2_f)
    biases = biases.at[0, 2].set(bo_f[0])

    return (w1.astype(jnp.bfloat16),
            w2_f.astype(jnp.bfloat16),
            wo_f.astype(jnp.bfloat16),
            biases)


def binary_classification_forward(x, params, *, batch_tile=None):
    """x: [N, 12] float.  Returns [N, 1] float32 logits (eval-mode forward)."""
    N, F = x.shape
    assert F == IN_DIM

    if batch_tile is None:
        batch_tile = _pick_batch_tile(N)
    batch_tile = max(_LANE, _round_up(batch_tile, _LANE))

    w1_bf, w2_bf, wo_bf, biases = fold_batchnorm(params)

    grid = (pl.cdiv(N, batch_tile),)            # ragged edge handled by Pallas
    full = lambda shape: pl.BlockSpec(shape, lambda i: (0, 0))

    out = pl.pallas_call(
        _mlp_kernel,
        out_shape=jax.ShapeDtypeStruct((OUT_DIM, N), jnp.float32),
        grid=grid,
        in_specs=[
            pl.BlockSpec((batch_tile, IN_DIM), lambda i: (i, 0)),  # x batch-tiled
            full((HID, IN_DIM)),       # W1   (out, in)
            full((HID, HID)),          # W2'  (BN1 folded)
            full((OUT_DIM, HID)),      # Wo'  (BN2 folded)
            full((HID, 3)),            # packed bias columns
        ],
        out_specs=pl.BlockSpec((OUT_DIM, batch_tile), lambda i: (0, i)),
        compiler_params=pltpu.CompilerParams(
            dimension_semantics=("parallel",),
            vmem_limit_bytes=32 * 1024 * 1024),
    )(x.astype(jnp.float32), w1_bf, w2_bf, wo_bf, biases)

    # (1, N) -> (N, 1): identical row-major linear order, free reshape.
    return out.reshape(N, OUT_DIM)


def init_params(key):
    """Deterministic synthetic parameters in PyTorch layout (weight = [out, in])."""
    ks = jax.random.split(key, 10)
    w1 = jax.random.normal(ks[0], (HID, IN_DIM), jnp.float32) * 0.1   # layer_1.weight
    b1 = jax.random.normal(ks[1], (HID,), jnp.float32) * 0.1
    w2 = jax.random.normal(ks[2], (HID, HID), jnp.float32) * 0.1      # layer_2.weight
    b2 = jax.random.normal(ks[3], (HID,), jnp.float32) * 0.1
    wo = jax.random.normal(ks[4], (OUT_DIM, HID), jnp.float32) * 0.1  # layer_out.weight
    bo = jax.random.normal(ks[5], (OUT_DIM,), jnp.float32) * 0.1
    # BatchNorm1d(64) x2: gamma, beta, running_mean, running_var
    g1 = 1.0 + 0.05 * jax.random.normal(ks[6], (HID,), jnp.float32)
    be1 = 0.05 * jax.random.normal(ks[7], (HID,), jnp.float32)
    m1 = 0.1 * jax.random.normal(ks[8], (HID,), jnp.float32)
    v1 = 1.0 + 0.1 * jax.random.uniform(ks[9], (HID,), jnp.float32)
    g2 = jnp.ones((HID,), jnp.float32)
    be2 = jnp.zeros((HID,), jnp.float32)
    m2 = jnp.zeros((HID,), jnp.float32)
    v2 = jnp.ones((HID,), jnp.float32)
    return (w1, b1, g1, be1, m1, v1, w2, b2, g2, be2, m2, v2, wo, bo)


def reference_forward(x, params):
    """Pure-JAX f32 reference with the original (unfolded) eval-mode semantics."""
    (w1, b1, g1, be1, m1, v1, w2, b2, g2, be2, m2, v2, wo, bo) = params
    h = jnp.maximum(x @ w1.T + b1, 0.0)
    h = (h - m1) / jnp.sqrt(v1 + EPS) * g1 + be1
    h = jnp.maximum(h @ w2.T + b2, 0.0)
    h = (h - m2) / jnp.sqrt(v2 + EPS) * g2 + be2
    return h @ wo.T + bo


if __name__ == "__main__":
    key = jax.random.PRNGKey(0)
    kx, kp = jax.random.split(key)

    # Deliberately not a multiple of the tile size: exercises the ragged last
    # block (non-divisible grid) and a 2-step parallel grid.
    N = 200
    x = jax.random.normal(kx, (N, IN_DIM), jnp.float32)
    params = init_params(kp)

    out = jax.block_until_ready(binary_classification_forward(x, params))
    ref = reference_forward(x, params)

    assert out.shape == (N, OUT_DIM)
    max_err = jnp.max(jnp.abs(out - ref))
    # bf16 matmul operands vs. f32 reference -> relaxed tolerance.
    assert jnp.allclose(out, ref, atol=3e-2, rtol=3e-2), f"max abs err = {max_err}"
    print("KERNEL_OK")
</pallas_src>

<mosaic_0001>
module attributes {stable_mosaic.version = 11 : i64} {
  func.func @_mlp_kernel(%arg0: i32, %arg1: memref<128x12xf32, #tpu.memory_space<vmem>>, %arg2: memref<64x12xbf16, #tpu.memory_space<vmem>>, %arg3: memref<64x64xbf16, #tpu.memory_space<vmem>>, %arg4: memref<1x64xbf16, #tpu.memory_space<vmem>>, %arg5: memref<64x3xf32, #tpu.memory_space<vmem>>, %arg6: memref<1x128xf32, #tpu.memory_space<vmem>>) attributes {dimension_semantics = [#tpu.dimension_semantics<parallel>], iteration_bounds = array<i64: 2>, scalar_prefetch = 0 : i64, scratch_operands = 0 : i64, tpu.core_type = #tpu.core_type<tc>, window_params = [{transform_indices = @transform_0, window_bounds = array<i64: 128, 12>}, {pipeline_mode = #tpu.pipeline_mode<synchronous>, transform_indices = @transform_1, window_bounds = array<i64: 64, 12>}, {pipeline_mode = #tpu.pipeline_mode<synchronous>, transform_indices = @transform_2, window_bounds = array<i64: 64, 64>}, {pipeline_mode = #tpu.pipeline_mode<synchronous>, transform_indices = @transform_3, window_bounds = array<i64: 1, 64>}, {pipeline_mode = #tpu.pipeline_mode<synchronous>, transform_indices = @transform_4, window_bounds = array<i64: 64, 3>}, {transform_indices = @transform_5, window_bounds = array<i64: 1, 128>}]} {
    %c0 = arith.constant 0 : index
    %c0_0 = arith.constant 0 : index
    %0 = vector.load %arg1[%c0, %c0_0] : memref<128x12xf32, #tpu.memory_space<vmem>>, vector<128x12xf32>
    %1 = arith.truncf %0 : vector<128x12xf32> to vector<128x12xbf16>
    %c0_1 = arith.constant 0 : index
    %c0_2 = arith.constant 0 : index
    %2 = vector.load %arg5[%c0_1, %c0_2] : memref<64x3xf32, #tpu.memory_space<vmem>>, vector<64x3xf32>
    %3 = vector.extract_strided_slice %2 {offsets = [0, 0], sizes = [64, 1], strides = [1, 1]} : vector<64x3xf32> to vector<64x1xf32>
    %4 = vector.extract_strided_slice %2 {offsets = [0, 1], sizes = [64, 1], strides = [1, 1]} : vector<64x3xf32> to vector<64x1xf32>
    %5 = vector.extract_strided_slice %2 {offsets = [0, 2], sizes = [1, 1], strides = [1, 1]} : vector<64x3xf32> to vector<1x1xf32>
    %c0_3 = arith.constant 0 : index
    %c0_4 = arith.constant 0 : index
    %6 = vector.load %arg2[%c0_3, %c0_4] : memref<64x12xbf16, #tpu.memory_space<vmem>>, vector<64x12xbf16>
    %cst = arith.constant dense<0.000000e+00> : vector<64x128xf32>
    %7 = tpu.matmul %6, %1, %cst {dimension_numbers = #tpu.dot_dimension_numbers<[1], [1], [0], [0], [0, 0, 1, 0], [], []>} : vector<64x12xbf16>, vector<128x12xbf16>, vector<64x128xf32> -> vector<64x128xf32>
    %8 = vector.broadcast %3 : vector<64x1xf32> to vector<64x128xf32>
    %9 = arith.addf %7, %8 : vector<64x128xf32>
    %cst_5 = arith.constant 0.000000e+00 : f32
    %10 = vector.broadcast %cst_5 : f32 to vector<64x128xf32>
    %11 = arith.maximumf %9, %10 : vector<64x128xf32>
    %c0_6 = arith.constant 0 : index
    %c0_7 = arith.constant 0 : index
    %12 = vector.load %arg3[%c0_6, %c0_7] : memref<64x64xbf16, #tpu.memory_space<vmem>>, vector<64x64xbf16>
    %13 = arith.truncf %11 : vector<64x128xf32> to vector<64x128xbf16>
    %cst_8 = arith.constant dense<0.000000e+00> : vector<64x128xf32>
    %14 = tpu.matmul %12, %13, %cst_8 {dimension_numbers = #tpu.dot_dimension_numbers<[1], [0], [0], [1], [0, 0, 1, 1], [], []>} : vector<64x64xbf16>, vector<64x128xbf16>, vector<64x128xf32> -> vector<64x128xf32>
    %15 = vector.broadcast %4 : vector<64x1xf32> to vector<64x128xf32>
    %16 = arith.addf %14, %15 : vector<64x128xf32>
    %cst_9 = arith.constant 0.000000e+00 : f32
    %17 = vector.broadcast %cst_9 : f32 to vector<64x128xf32>
    %18 = arith.maximumf %16, %17 : vector<64x128xf32>
    %c0_10 = arith.constant 0 : index
    %c0_11 = arith.constant 0 : index
    %19 = vector.load %arg4[%c0_10, %c0_11] : memref<1x64xbf16, #tpu.memory_space<vmem>>, vector<1x64xbf16>
    %20 = arith.truncf %18 : vector<64x128xf32> to vector<64x128xbf16>
    %cst_12 = arith.constant dense<0.000000e+00> : vector<1x128xf32>
    %21 = tpu.matmul %19, %20, %cst_12 {dimension_numbers = #tpu.dot_dimension_numbers<[1], [0], [0], [1], [0, 0, 1, 1], [], []>} : vector<1x64xbf16>, vector<64x128xbf16>, vector<1x128xf32> -> vector<1x128xf32>
    %22 = vector.broadcast %5 : vector<1x1xf32> to vector<1x128xf32>
    %23 = arith.addf %21, %22 : vector<1x128xf32>
    %c0_13 = arith.constant 0 : index
    %c0_14 = arith.constant 0 : index
    %24 = vector.load %arg6[%c0_13, %c0_14] : memref<1x128xf32, #tpu.memory_space<vmem>>, vector<1x128xf32>
    tpu.vector_store %arg6[%c0_13, %c0_14], %23 {strides = array<i32>} : memref<1x128xf32, #tpu.memory_space<vmem>>, vector<1x128xf32>,
    return
  }
  func.func @transform_0(%arg0: i32) -> (i32, i32) {
    %c0_i32 = arith.constant 0 : i32
    %c0_i32_0 = arith.constant 0 : i32
    return %arg0, %c0_i32 : i32, i32
  }
  func.func @transform_1(%arg0: i32) -> (i32, i32) {
    %c0_i32 = arith.constant 0 : i32
    %c0_i32_0 = arith.constant 0 : i32
    %c0_i32_1 = arith.constant 0 : i32
    return %c0_i32, %c0_i32_0 : i32, i32
  }
  func.func @transform_2(%arg0: i32) -> (i32, i32) {
    %c0_i32 = arith.constant 0 : i32
    %c0_i32_0 = arith.constant 0 : i32
    %c0_i32_1 = arith.constant 0 : i32
    return %c0_i32, %c0_i32_0 : i32, i32
  }
  func.func @transform_3(%arg0: i32) -> (i32, i32) {
    %c0_i32 = arith.constant 0 : i32
    %c0_i32_0 = arith.constant 0 : i32
    %c0_i32_1 = arith.constant 0 : i32
    return %c0_i32, %c0_i32_0 : i32, i32
  }
  func.func @transform_4(%arg0: i32) -> (i32, i32) {
    %c0_i32 = arith.constant 0 : i32
    %c0_i32_0 = arith.constant 0 : i32
    %c0_i32_1 = arith.constant 0 : i32
    return %c0_i32, %c0_i32_0 : i32, i32
  }
  func.func @transform_5(%arg0: i32) -> (i32, i32) {
    %c0_i32 = arith.constant 0 : i32
    %c0_i32_0 = arith.constant 0 : i32
    return %c0_i32, %arg0 : i32, i32
  }
}

</mosaic_0001>

<llo_original>
// kernel: tpu_custom_call.1
$region0: #{tpu_custom_call.1}
  #allocation0 [shape = 'u32[]', space=smem, size = 0x4, offset = 0x4, fixed_abs, tag = 'smem constant byte address 0x4 - core index']
  #allocation1 [shape = 'u32[144,128]{1,0:T(1,128)}', space=vmem, size = 0x12000, scoped, tag = 'internal scratch']
  %s0 = inlined_call_operand.vmem [shape: f32[200,12], index: 0, kind: input, shape index: {}]
  %s1 = inlined_call_operand.vmem [shape: bf16[64,12], index: 1, kind: input, shape index: {}]
  %s2 = inlined_call_operand.vmem [shape: bf16[64,64], index: 2, kind: input, shape index: {}]
  %s3 = inlined_call_operand.vmem [shape: bf16[1,64], index: 3, kind: input, shape index: {}]
  %s4 = inlined_call_operand.vmem [shape: f32[64,3], index: 4, kind: input, shape index: {}]
  %s5 = inlined_call_operand.hbm [shape: f32[1,200], index: 5, kind: output, shape index: {}]
  %s6 = sld [smem:[#allocation0]]
  $region53: #{tpu_custom_call.1} parent=0
    _
  %s8 = ssub.s32 1, %s6
  %s9 = scalar_select 0, %s8, %s6
  $region1: #{tpu_custom_call.1} parent=0
    #allocation2 [shape = 'u8[1024]{0}', space=vmem, size = 0x400, scoped, tag = 'output window, operand 0']
    #allocation3 [shape = 's32[2]{0}', space=sflag, size = 0x8, scoped, tag = 'scoped memory for tpu_custom_call.1']
    %10 = vsyncpa [#allocation3], 0
    %s11 = scalar_lea.sflag [#allocation3], 1
    %12 = vsyncpa %s11, 0
    loop: start=0, step=1, limit=4
    $region2: #{tpu_custom_call.1} parent=1 // loop_pre_header
      _
    $region3: #{tpu_custom_call.1} parent=1 // loop_header
      %s14 = sphi 0, %s18
      %p15 = scmp.ge.s32.totalorder %s14, 4
      %s24 = sphi 0, %s26
      %s27 = sphi 0, %s24
      %s28 = sphi 0, %s27
      %s44 = sphi 0, %s28
      %s48 = sphi 0, %s48
      %s50 = sphi 0, %s48
      %s51 = sphi 0, %s50
      %s65 = sphi 0, %s51
      %s69 = sphi 0, %s69
      %s71 = sphi 0, %s69
      %s72 = sphi 0, %s71
      %s86 = sphi 0, %s72
      %s90 = sphi 0, %s90
      %s92 = sphi 0, %s90
      %s93 = sphi 0, %s92
      %s107 = sphi 0, %s93
      %s111 = sphi 0, %s111
      %s113 = sphi 0, %s111
      %s114 = sphi 0, %s113
      %s128 = sphi 0, %s114
      %s134 = sphi 0, %s136
      %s137 = sphi 0, %s134
      %s138 = sphi 0, %s137
      %s154 = sphi 0, %s138
    $region4: #{tpu_custom_call.1} parent=1 // loop_header_branch
      %17 = sbr.rel (%p15) target = $region8
    $region5: #{tpu_custom_call.1} parent=1 // loop_body
      %s19 = ssub.s32 %s14, 1
      %s20 = ssub.s32 %s14, 2
      %s21 = sadd.s32 %s14, 1
      %s22 = ssub.s32 %s14, %s21
      %p23 = scmp.eq.s32.totalorder %s22, 0
      %s25 = sadd.s32 %s24, 1
      %s26 = scalar_select %p23, %s24, %s25
      %p29 = pneg %p23
      %p30 = scmp.eq.s32.totalorder %s14, 1
      %p31 = por %p29, %p30
      %p32 = scmp.ne.s32.totalorder %s24, %s27
      %p33 = scmp.eq.s32.totalorder %s14, 0
      %p34 = por %p32, %p33
      %p35 = scmp.ne.s32.totalorder %s24, %s27
      %p36 = scmp.eq.s32.totalorder %s19, 1
      %p37 = por %p35, %p36
      %p38 = scmp.ne.s32.totalorder %s27, %s28
      %p39 = scmp.eq.s32.totalorder %s19, 0
      %p40 = por %p38, %p39
      %p41 = scmp.ne.s32.totalorder %s27, %s28
      %p42 = scmp.eq.s32.totalorder %s20, 1
      %p43 = por %p41, %p42
      %p45 = scmp.ne.s32.totalorder %s28, %s44
      %p46 = scmp.eq.s32.totalorder %s20, 0
      %p47 = por %p45, %p46
      %s49 = sadd.s32 %s48, 1
      %p52 = scmp.eq.s32.totalorder %s14, 1
      %p53 = scmp.ne.s32.totalorder %s48, %s50
      %p54 = scmp.eq.s32.totalorder %s14, 0
      %p55 = por %p53, %p54
      %p56 = scmp.ne.s32.totalorder %s48, %s50
      %p57 = scmp.eq.s32.totalorder %s19, 1
      %p58 = por %p56, %p57
      %p59 = scmp.ne.s32.totalorder %s50, %s51
      %p60 = scmp.eq.s32.totalorder %s19, 0
      %p61 = por %p59, %p60
      %p62 = scmp.ne.s32.totalorder %s50, %s51
      %p63 = scmp.eq.s32.totalorder %s20, 1
      %p64 = por %p62, %p63
      %p66 = scmp.ne.s32.totalorder %s51, %s65
      %p67 = scmp.eq.s32.totalorder %s20, 0
      %p68 = por %p66, %p67
      %s70 = sadd.s32 %s69, 1
      %p73 = scmp.eq.s32.totalorder %s14, 1
      %p74 = scmp.ne.s32.totalorder %s69, %s71
      %p75 = scmp.eq.s32.totalorder %s14, 0
      %p76 = por %p74, %p75
      %p77 = scmp.ne.s32.totalorder %s69, %s71
      %p78 = scmp.eq.s32.totalorder %s19, 1
      %p79 = por %p77, %p78
      %p80 = scmp.ne.s32.totalorder %s71, %s72
      %p81 = scmp.eq.s32.totalorder %s19, 0
      %p82 = por %p80, %p81
      %p83 = scmp.ne.s32.totalorder %s71, %s72
      %p84 = scmp.eq.s32.totalorder %s20, 1
      %p85 = por %p83, %p84
      %p87 = scmp.ne.s32.totalorder %s72, %s86
      %p88 = scmp.eq.s32.totalorder %s20, 0
      %p89 = por %p87, %p88
      %s91 = sadd.s32 %s90, 1
      %p94 = scmp.eq.s32.totalorder %s14, 1
      %p95 = scmp.ne.s32.totalorder %s90, %s92
      %p96 = scmp.eq.s32.totalorder %s14, 0
      %p97 = por %p95, %p96
      %p98 = scmp.ne.s32.totalorder %s90, %s92
      %p99 = scmp.eq.s32.totalorder %s19, 1
      %p100 = por %p98, %p99
      %p101 = scmp.ne.s32.totalorder %s92, %s93
      %p102 = scmp.eq.s32.totalorder %s19, 0
      %p103 = por %p101, %p102
      %p104 = scmp.ne.s32.totalorder %s92, %s93
      %p105 = scmp.eq.s32.totalorder %s20, 1
      %p106 = por %p104, %p105
      %p108 = scmp.ne.s32.totalorder %s93, %s107
      %p109 = scmp.eq.s32.totalorder %s20, 0
      %p110 = por %p108, %p109
      %s112 = sadd.s32 %s111, 1
      %p115 = scmp.eq.s32.totalorder %s14, 1
      %p116 = scmp.ne.s32.totalorder %s111, %s113
      %p117 = scmp.eq.s32.totalorder %s14, 0
      %p118 = por %p116, %p117
      %p119 = scmp.ne.s32.totalorder %s111, %s113
      %p120 = scmp.eq.s32.totalorder %s19, 1
      %p121 = por %p119, %p120
      %p122 = scmp.ne.s32.totalorder %s113, %s114
      %p123 = scmp.eq.s32.totalorder %s19, 0
      %p124 = por %p122, %p123
      %p125 = scmp.ne.s32.totalorder %s113, %s114
      %p126 = scmp.eq.s32.totalorder %s20, 1
      %p127 = por %p125, %p126
      %p129 = scmp.ne.s32.totalorder %s114, %s128
      %p130 = scmp.eq.s32.totalorder %s20, 0
      %p131 = por %p129, %p130
      %s132 = ssub.s32 %s14, %s21
      %p133 = scmp.eq.s32.totalorder %s132, 0
      %s135 = sadd.s32 %s134, 1
      %s136 = scalar_select %p133, %s134, %s135
      %p139 = pneg %p133
      %p140 = scmp.eq.s32.totalorder %s14, 1
      %p141 = por %p139, %p140
      %p142 = scmp.ne.s32.totalorder %s134, %s137
      %p143 = scmp.eq.s32.totalorder %s14, 0
      %p144 = por %p142, %p143
      %p145 = scmp.ne.s32.totalorder %s134, %s137
      %p146 = scmp.eq.s32.totalorder %s19, 1
      %p147 = por %p145, %p146
      %p148 = scmp.ne.s32.totalorder %s137, %s138
      %p149 = scmp.eq.s32.totalorder %s19, 0
      %p150 = por %p148, %p149
      %p151 = scmp.ne.s32.totalorder %s137, %s138
      %p152 = scmp.eq.s32.totalorder %s20, 1
      %p153 = por %p151, %p152
      %p155 = scmp.ne.s32.totalorder %s138, %s154
      %p156 = scmp.eq.s32.totalorder %s20, 0
      %p157 = por %p155, %p156
      %p158 = scmp.le.s32.totalorder 1, %s14
      %p159 = scmp.lt.s32.totalorder %s14, 3
      %p160 = pnand %p158, %p159
      %p161 = pneg %p160
      // Predicated region
      $region9: #{tpu_custom_call.1} parent=5 // pred_check
        _
      $region10: #{tpu_custom_call.1} parent=5 // pred_check_branch
        %163 = sbr.rel (%p160) target = $region12
      $region11: #{tpu_custom_call.1} parent=5 // pred_region
        %s164 = ssub.s32 %s14, 1
        // Predicated region
        $region13: #{tpu_custom_call.1} parent=11 // pred_check
          %p165 = pneg %p61
        $region14: #{tpu_custom_call.1} parent=11 // pred_check_branch
          %167 = sbr.rel (%p165) target = $region16
        $region15: #{tpu_custom_call.1} parent=11 // pred_region
          _
        $region16: #{tpu_custom_call.1} parent=11 // pred_fallthru
          _
        // Predicated region
        $region17: #{tpu_custom_call.1} parent=11 // pred_check
          %p168 = pneg %p82
        $region18: #{tpu_custom_call.1} parent=11 // pred_check_branch
          %170 = sbr.rel (%p168) target = $region20
        $region19: #{tpu_custom_call.1} parent=11 // pred_region
          _
        $region20: #{tpu_custom_call.1} parent=11 // pred_fallthru
          _
        // Predicated region
        $region21: #{tpu_custom_call.1} parent=11 // pred_check
          %p171 = pneg %p103
        $region22: #{tpu_custom_call.1} parent=11 // pred_check_branch
          %173 = sbr.rel (%p171) target = $region24
        $region23: #{tpu_custom_call.1} parent=11 // pred_region
          _
        $region24: #{tpu_custom_call.1} parent=11 // pred_fallthru
          _
        // Predicated region
        $region25: #{tpu_custom_call.1} parent=11 // pred_check
          %p174 = pneg %p124
        $region26: #{tpu_custom_call.1} parent=11 // pred_check_branch
          %176 = sbr.rel (%p174) target = $region28
        $region27: #{tpu_custom_call.1} parent=11 // pred_region
          _
        $region28: #{tpu_custom_call.1} parent=11 // pred_fallthru
          _
      $region12: #{tpu_custom_call.1} parent=5 // pred_fallthru
        _
      %p177 = scmp.lt.s32.totalorder %s14, 2
      // Predicated region
      $region29: #{tpu_custom_call.1} parent=5 // pred_check
        %p178 = pneg %p177
      $region30: #{tpu_custom_call.1} parent=5 // pred_check_branch
        %180 = sbr.rel (%p178) target = $region32
      $region31: #{tpu_custom_call.1} parent=5 // pred_region
        // Predicated region
        $region33: #{tpu_custom_call.1} parent=31 // pred_check
          %p181 = pneg %p34
        $region34: #{tpu_custom_call.1} parent=31 // pred_check_branch
          %183 = sbr.rel (%p181) target = $region36
        $region35: #{tpu_custom_call.1} parent=31 // pred_region
          %s184 = smul.u32 16, %s14
          %s185 = ssub.s32 25, %s184
          %p186 = scmp.lt.s32.totalorder %s185, 16
          %s187 = scalar_select %p186, %s185, 16
          %s188 = smul.u32 128, %s187
          %p189 = scmp.lt.s32.totalorder %s184, 24
          %s190 = scalar_select %p189, %s184, 24
          %s191 = smul.addr %s190, 8
          %s192 = scalar_lea.vmem %s0, %s191
          %s193 = smul.u32 16, %s14
          %s194 = ssub.s32 25, %s193
          %p195 = scmp.lt.s32.totalorder %s194, 16
          %s196 = scalar_select %p195, %s194, 16
          %s197 = smul.u32 128, %s196
        $region36: #{tpu_custom_call.1} parent=31 // pred_fallthru
          _
      $region32: #{tpu_custom_call.1} parent=5 // pred_fallthru
        _
      %p198 = scmp.le.s32.totalorder 1, %s14
      %p199 = scmp.lt.s32.totalorder %s14, 3
      %p200 = pnand %p198, %p199
      %p201 = pneg %p200
      // Predicated region
      $region37: #{tpu_custom_call.1} parent=5 // pred_check
        _
      $region38: #{tpu_custom_call.1} parent=5 // pred_check_branch
        %203 = sbr.rel (%p200) target = $region40
      $region39: #{tpu_custom_call.1} parent=5 // pred_region
        %s204 = ssub.s32 %s14, 1
        %s205 = smul.u32 16, %s19
        %s206 = ssub.s32 25, %s205
        %p207 = scmp.lt.s32.totalorder %s206, 16
        %s208 = scalar_select %p207, %s206, 16
        %s209 = smul.u32 128, %s208
        %p210 = scmp.lt.s32.totalorder %s205, 24
        %s211 = scalar_select %p210, %s205, 24
        %s212 = smul.addr %s211, 8
        %s213 = scalar_lea.vmem %s0, %s212
        %p214 = pneg %p40
        %p215 = pneg %p37
        %p216 = pneg %p61
        %p217 = pneg %p58
        %p218 = pneg %p82
        %p219 = pneg %p79
        %p220 = pneg %p103
        %p221 = pneg %p100
        %p222 = pneg %p124
        %p223 = pneg %p121
        %p224 = pneg %p150
        %p225 = pneg %p147
        %s226 = sand.u32 %s137, 1
        %s227 = scalar_lea.sflag [#allocation3], %s226
        %s228 = sand.u32 %s137, 1
        %s229 = scalar_lea.vmem [#allocation2], %s228
        %s230 = smul.u32 16, %s19
        %s231 = ssub.s32 25, %s230
        %p232 = scmp.lt.s32.totalorder %s231, 16
        %s233 = scalar_select %p232, %s231, 16
        %s234 = smul.u32 128, %s233
        %p235 = scmp.lt.s32.totalorder %s230, 24
        %s236 = scalar_select %p235, %s230, 24
        %s237 = smul.addr %s236, 8
        %s238 = scalar_lea.vmem %s0, %s237
        %s239 = smul.u32 16, %s19
        %s240 = ssub.s32 25, %s239
        %p241 = scmp.lt.s32.totalorder %s240, 16
        %s242 = scalar_select %p241, %s240, 16
        %s243 = smul.u32 128, %s242
        %v245 = vld [vmem:[%s238] sm:$0xff]
        %v246 = vld [vmem:[%s238 + $0x8] sm:$0xff]
        %v247 = vld [vmem:[%s238 + $0x10] sm:$0xff]
        %v248 = vld [vmem:[%s238 + $0x18] sm:$0xff]
        %v249 = vld [vmem:[%s238 + $0x20] sm:$0xff]
        %v250 = vld [vmem:[%s238 + $0x28] sm:$0xff]
        %v251 = vld [vmem:[%s238 + $0x30] sm:$0xff]
        %v252 = vld [vmem:[%s238 + $0x38] sm:$0xff]
        %v253 = vld [vmem:[%s238 + $0x40] sm:$0xff]
        %v254 = vld [vmem:[%s238 + $0x48] sm:$0xff]
        %v255 = vld [vmem:[%s238 + $0x50] sm:$0xff]
        %v256 = vld [vmem:[%s238 + $0x58] sm:$0xff]
        %v257 = vld [vmem:[%s238 + $0x60] sm:$0xff]
        %v258 = vld [vmem:[%s238 + $0x68] sm:$0xff]
        %v259 = vld [vmem:[%s238 + $0x70] sm:$0xff]
        %v260 = vld [vmem:[%s238 + $0x78] sm:$0xff]
        %v261 = vpack.c.bf16 %v246, %v245
        %v262 = vpack.c.bf16 %v248, %v247
        %v263 = vpack.c.bf16 %v250, %v249
        %v264 = vpack.c.bf16 %v252, %v251
        %v265 = vpack.c.bf16 %v254, %v253
        %v266 = vpack.c.bf16 %v256, %v255
        %v267 = vpack.c.bf16 %v258, %v257
        %v268 = vpack.c.bf16 %v260, %v259
        %v269 = vld [vmem:[%s4] sm:$0xff]
        %v270 = vld [vmem:[%s4 + $0x8] sm:$0xff]
        %v271 = vld [vmem:[%s4 + $0x10] sm:$0xff]
        %v272 = vld [vmem:[%s4 + $0x18] sm:$0xff]
        %v273 = vld [vmem:[%s4 + $0x20] sm:$0xff]
        %v274 = vld [vmem:[%s4 + $0x28] sm:$0xff]
        %v275 = vld [vmem:[%s4 + $0x30] sm:$0xff]
        %v276 = vld [vmem:[%s4 + $0x38] sm:$0xff]
        %v277 = vld [vmem:[%s1] sm:$0xf]
        %v278 = vld [vmem:[%s1 + $0x4] sm:$0xf]
        %v279 = vld [vmem:[%s1 + $0x8] sm:$0xf]
        %v280 = vld [vmem:[%s1 + $0xc] sm:$0xf]
        %v281 = vld [vmem:[%s1 + $0x10] sm:$0xf]
        %v282 = vld [vmem:[%s1 + $0x14] sm:$0xf]
        %v283 = vld [vmem:[%s1 + $0x18] sm:$0xf]
        %v284 = vld [vmem:[%s1 + $0x1c] sm:$0xf]
        %286 = vset.pattern.permute.xlu0 0
        %287 = vperm.xlu0 %286, %v269
        %v288 = vpop.permute.xlu0 %287
        %291 = vset.pattern.permute.xlu0 0
        %292 = vperm.xlu0 %291, %v270
        %v293 = vpop.permute.xlu0 %292
        %296 = vset.pattern.permute.xlu0 0
        %297 = vperm.xlu0 %296, %v271
        %v298 = vpop.permute.xlu0 %297
        %301 = vset.pattern.permute.xlu0 0
        %302 = vperm.xlu0 %301, %v272
        %v303 = vpop.permute.xlu0 %302
        %306 = vset.pattern.permute.xlu0 0
        %307 = vperm.xlu0 %306, %v273
        %v308 = vpop.permute.xlu0 %307
        %311 = vset.pattern.permute.xlu0 0
        %312 = vperm.xlu0 %311, %v274
        %v313 = vpop.permute.xlu0 %312
        %316 = vset.pattern.permute.xlu0 0
        %317 = vperm.xlu0 %316, %v275
        %v318 = vpop.permute.xlu0 %317
        %321 = vset.pattern.permute.xlu0 0
        %322 = vperm.xlu0 %321, %v276
        %v323 = vpop.permute.xlu0 %322
        %v333 = vunpack.c.l.b16 %v277
        %v334 = vunpack.c.l.b16 %v278
        %v335 = vunpack.c.l.b16 %v279
        %v336 = vunpack.c.l.b16 %v280
        %v337 = vunpack.c.l.b16 %v281
        %v338 = vunpack.c.l.b16 %v282
        %v339 = vunpack.c.l.b16 %v283
        %v340 = vunpack.c.l.b16 %v284
        %v341 = vpack.c.b16 %v334, %v333
        %v342 = vpack.c.b16 %v336, %v335
        %v343 = vpack.c.b16 %v338, %v337
        %v344 = vpack.c.b16 %v340, %v339
        %vm345 = vcmask 97280
        %v347 = vsel %vm345, %v341, 0
        %v350 = vsel %vm345, %v342, 0
        %v353 = vsel %vm345, %v343, 0
        %v356 = vsel %vm345, %v344, 0
        %v359 = vsel %vm345, %v261, 0
        %v362 = vsel %vm345, %v262, 0
        %v365 = vsel %vm345, %v263, 0
        %v368 = vsel %vm345, %v264, 0
        %v371 = vsel %vm345, %v265, 0
        %v374 = vsel %vm345, %v266, 0
        %v377 = vsel %vm345, %v267, 0
        %v380 = vsel %vm345, %v268, 0
        %382 = vmatprep.subr.bf16.mxu0 0
        %383 = vmatpush1.bf16.xpose.msra.mxu0 %v359
        %384 = vmatprep.subr.bf16.mxu0 0
        %385 = vmatpush1.bf16.xpose.msra.mxu0 %v362
        %386 = vmatprep.subr.bf16.mxu0 0
        %387 = vmatpush1.bf16.xpose.msra.mxu0 %v365
        %388 = vmatprep.subr.bf16.mxu0 0
        %389 = vmatpush1.bf16.xpose.msra.mxu0 %v368
        %390 = vmatprep.subr.bf16.mxu0 0
        %391 = vmatpush1.bf16.xpose.msra.mxu0 %v371
        %392 = vmatprep.subr.bf16.mxu0 0
        %393 = vmatpush1.bf16.xpose.msra.mxu0 %v374
        %394 = vmatprep.subr.bf16.mxu0 0
        %395 = vmatpush1.bf16.xpose.msra.mxu0 %v377
        %396 = vmatprep.subr.bf16.mxu0 0
        %397 = vmatpush1.bf16.xpose.msra.mxu0 %v380
        %398 = vmatprep.subr.bf16.mxu0 0
        %399 = vmatpush1.bf16.xpose.msra.mxu0 0
        %400 = vmatprep.subr.bf16.mxu0 0
        %401 = vmatpush1.bf16.xpose.msra.mxu0 0
        %402 = vmatprep.subr.bf16.mxu0 0
        %403 = vmatpush1.bf16.xpose.msra.mxu0 0
        %404 = vmatprep.subr.bf16.mxu0 0
        %405 = vmatpush1.bf16.xpose.msra.mxu0 0
        %406 = vmatprep.subr.bf16.mxu0 0
        %407 = vmatpush1.bf16.xpose.msra.mxu0 0
        %408 = vmatprep.subr.bf16.mxu0 0
        %409 = vmatpush1.bf16.xpose.msra.mxu0 0
        %410 = vmatprep.subr.bf16.mxu0 0
        %411 = vmatpush1.bf16.xpose.msra.mxu0 0
        %412 = vmatprep.subr.bf16.mxu0 0
        %413 = vmatpush1.bf16.xpose.msra.mxu0 0
        %414 = vmatprep.mubr.bf16.mxu0 0
        %415 = vmatmul.mubr.bf16.gmra.mrb[0].mxu0 %v347
        %v416 = vpop.f32.mrb[0].mxu0
        %v417 = vadd.f32 %v288, %v416
        %v418 = vpop.f32.mrb[0].mxu0
        %v419 = vpop.f32.mrb[0].mxu0
        %v420 = vadd.f32 %v293, %v419
        %v421 = vpop.f32.mrb[0].mxu0
        %422 = vmatprep.mubr.bf16.mxu0 0
        %423 = vmatmul.mubr.bf16.gmra.mrb[0].mxu0 %v350
        %v424 = vpop.f32.mrb[0].mxu0
        %v425 = vadd.f32 %v298, %v424
        %v426 = vpop.f32.mrb[0].mxu0
        %v427 = vpop.f32.mrb[0].mxu0
        %v428 = vadd.f32 %v303, %v427
        %v429 = vpop.f32.mrb[0].mxu0
        %430 = vmatprep.mubr.bf16.mxu0 0
        %431 = vmatmul.mubr.bf16.gmra.mrb[0].mxu0 %v353
        %v432 = vpop.f32.mrb[0].mxu0
        %v433 = vadd.f32 %v308, %v432
        %v434 = vpop.f32.mrb[0].mxu0
        %v435 = vpop.f32.mrb[0].mxu0
        %v436 = vadd.f32 %v313, %v435
        %v437 = vpop.f32.mrb[0].mxu0
        %438 = vmatprep.mubr.bf16.mxu0 0
        %439 = vmatmul.mubr.bf16.gmra.mrb[0].mxu0 %v356
        %v440 = vpop.f32.mrb[0].mxu0
        %v441 = vadd.f32 %v318, %v440
        %v442 = vpop.f32.mrb[0].mxu0
        %v443 = vpop.f32.mrb[0].mxu0
        %v444 = vadd.f32 %v323, %v443
        %v445 = vpop.f32.mrb[0].mxu0
        %446 = vdwg.mxu0
        %v447 = vmax.f32 %v417, 0.0
        %v448 = vmax.f32 %v420, 0.0
        %v449 = vmax.f32 %v425, 0.0
        %v450 = vmax.f32 %v428, 0.0
        %v451 = vmax.f32 %v433, 0.0
        %v452 = vmax.f32 %v436, 0.0
        %v453 = vmax.f32 %v441, 0.0
        %v454 = vmax.f32 %v444, 0.0
        %v455 = vld [vmem:[%s2] sm:$0xf]
        %v456 = vld [vmem:[%s2 + $0x4] sm:$0xf]
        %v457 = vld [vmem:[%s2 + $0x8] sm:$0xf]
        %v458 = vld [vmem:[%s2 + $0xc] sm:$0xf]
        %v459 = vld [vmem:[%s2 + $0x10] sm:$0xf]
        %v460 = vld [vmem:[%s2 + $0x14] sm:$0xf]
        %v461 = vld [vmem:[%s2 + $0x18] sm:$0xf]
        %v462 = vld [vmem:[%s2 + $0x1c] sm:$0xf]
        %v463 = vpack.c.bf16 %v448, %v447
        %v464 = vpack.c.bf16 %v450, %v449
        %v465 = vpack.c.bf16 %v452, %v451
        %v466 = vpack.c.bf16 %v454, %v453
        %467 = vset.pattern.permute.xlu0 1
        %468 = vperm.xlu0 %467, %v269
        %v469 = vpop.permute.xlu0 %468
        %471 = vset.pattern.permute.xlu0 1
        %472 = vperm.xlu0 %471, %v270
        %v473 = vpop.permute.xlu0 %472
        %475 = vset.pattern.permute.xlu0 1
        %476 = vperm.xlu0 %475, %v271
        %v477 = vpop.permute.xlu0 %476
        %479 = vset.pattern.permute.xlu0 1
        %480 = vperm.xlu0 %479, %v272
        %v481 = vpop.permute.xlu0 %480
        %483 = vset.pattern.permute.xlu0 1
        %484 = vperm.xlu0 %483, %v273
        %v485 = vpop.permute.xlu0 %484
        %487 = vset.pattern.permute.xlu0 1
        %488 = vperm.xlu0 %487, %v274
        %v489 = vpop.permute.xlu0 %488
        %491 = vset.pattern.permute.xlu0 1
        %492 = vperm.xlu0 %491, %v275
        %v493 = vpop.permute.xlu0 %492
        %495 = vset.pattern.permute.xlu0 1
        %496 = vperm.xlu0 %495, %v276
        %v497 = vpop.permute.xlu0 %496
        %v507 = vunpack.c.l.b16 %v455
        %v508 = vunpack.c.l.b16 %v456
        %v509 = vunpack.c.l.b16 %v457
        %v510 = vunpack.c.l.b16 %v458
        %v511 = vunpack.c.l.b16 %v459
        %v512 = vunpack.c.l.b16 %v460
        %v513 = vunpack.c.l.b16 %v461
        %v514 = vunpack.c.l.b16 %v462
        %v515 = vpack.c.b16 %v508, %v507
        %v516 = vpack.c.b16 %v510, %v509
        %v517 = vpack.c.b16 %v512, %v511
        %v518 = vpack.c.b16 %v514, %v513
        %vm519 = vcmask 523264
        %v521 = vsel %vm519, %v515, 0
        %v524 = vsel %vm519, %v516, 0
        %v527 = vsel %vm519, %v517, 0
        %v530 = vsel %vm519, %v518, 0
        %532 = vmatprep.subr.bf16.mxu0 0
        %533 = vmatpush1.bf16.msra.mxu0 %v463
        %534 = vmatprep.subr.bf16.mxu0 0
        %535 = vmatpush1.bf16.msra.mxu0 %v464
        %536 = vmatprep.subr.bf16.mxu0 0
        %537 = vmatpush1.bf16.msra.mxu0 %v465
        %538 = vmatprep.subr.bf16.mxu0 0
        %539 = vmatpush1.bf16.msra.mxu0 %v466
        %540 = vmatprep.subr.bf16.mxu0 0
        %541 = vmatpush1.bf16.msra.mxu0 0
        %542 = vmatprep.subr.bf16.mxu0 0
        %543 = vmatpush1.bf16.msra.mxu0 0
        %544 = vmatprep.subr.bf16.mxu0 0
        %545 = vmatpush1.bf16.msra.mxu0 0
        %546 = vmatprep.subr.bf16.mxu0 0
        %547 = vmatpush1.bf16.msra.mxu0 0
        %548 = vmatprep.subr.bf16.mxu0 0
        %549 = vmatpush1.bf16.msra.mxu0 0
        %550 = vmatprep.subr.bf16.mxu0 0
        %551 = vmatpush1.bf16.msra.mxu0 0
        %552 = vmatprep.subr.bf16.mxu0 0
        %553 = vmatpush1.bf16.msra.mxu0 0
        %554 = vmatprep.subr.bf16.mxu0 0
        %555 = vmatpush1.bf16.msra.mxu0 0
        %556 = vmatprep.subr.bf16.mxu0 0
        %557 = vmatpush1.bf16.msra.mxu0 0
        %558 = vmatprep.subr.bf16.mxu0 0
        %559 = vmatpush1.bf16.msra.mxu0 0
        %560 = vmatprep.subr.bf16.mxu0 0
        %561 = vmatpush1.bf16.msra.mxu0 0
        %562 = vmatprep.subr.bf16.mxu0 0
        %563 = vmatpush1.bf16.msra.mxu0 0
        %564 = vmatprep.mubr.bf16.mxu0 0
        %565 = vmatmul.mubr.bf16.gmra.mrb[0].mxu0 %v521
        %v566 = vpop.f32.mrb[0].mxu0
        %v567 = vadd.f32 %v469, %v566
        %v568 = vpop.f32.mrb[0].mxu0
        %v569 = vpop.f32.mrb[0].mxu0
        %v570 = vadd.f32 %v473, %v569
        %v571 = vpop.f32.mrb[0].mxu0
        %572 = vmatprep.mubr.bf16.mxu0 0
        %573 = vmatmul.mubr.bf16.gmra.mrb[0].mxu0 %v524
        %v574 = vpop.f32.mrb[0].mxu0
        %v575 = vadd.f32 %v477, %v574
        %v576 = vpop.f32.mrb[0].mxu0
        %v577 = vpop.f32.mrb[0].mxu0
        %v578 = vadd.f32 %v481, %v577
        %v579 = vpop.f32.mrb[0].mxu0
        %580 = vmatprep.mubr.bf16.mxu0 0
        %581 = vmatmul.mubr.bf16.gmra.mrb[0].mxu0 %v527
        %v582 = vpop.f32.mrb[0].mxu0
        %v583 = vadd.f32 %v485, %v582
        %v584 = vpop.f32.mrb[0].mxu0
        %v585 = vpop.f32.mrb[0].mxu0
        %v586 = vadd.f32 %v489, %v585
        %v587 = vpop.f32.mrb[0].mxu0
        %588 = vmatprep.mubr.bf16.mxu0 0
        %589 = vmatmul.mubr.bf16.gmra.mrb[0].mxu0 %v530
        %v590 = vpop.f32.mrb[0].mxu0
        %v591 = vadd.f32 %v493, %v590
        %v592 = vpop.f32.mrb[0].mxu0
        %v593 = vpop.f32.mrb[0].mxu0
        %v594 = vadd.f32 %v497, %v593
        %v595 = vpop.f32.mrb[0].mxu0
        %596 = vdwg.mxu0
        %v597 = vmax.f32 %v567, 0.0
        %v598 = vmax.f32 %v570, 0.0
        %v599 = vmax.f32 %v575, 0.0
        %v600 = vmax.f32 %v578, 0.0
        %v601 = vmax.f32 %v583, 0.0
        %v602 = vmax.f32 %v586, 0.0
        %v603 = vmax.f32 %v591, 0.0
        %v604 = vmax.f32 %v594, 0.0
        %v605 = vld [vmem:[%s3] sm:$0x1]
        %v606 = vpack.c.bf16 %v598, %v597
        %v607 = vpack.c.bf16 %v600, %v599
        %v608 = vpack.c.bf16 %v602, %v601
        %v609 = vpack.c.bf16 %v604, %v603
        %610 = vset.pattern.permute.xlu0 2
        %611 = vperm.xlu0 %610, %v269
        %v612 = vpop.permute.xlu0 %611
        %v615 = vsel %vm519, %v605, 0
        %617 = vmatprep.subr.bf16.mxu0 0
        %618 = vmatpush1.bf16.msra.mxu0 %v606
        %619 = vmatprep.subr.bf16.mxu0 0
        %620 = vmatpush1.bf16.msra.mxu0 %v607
        %621 = vmatprep.subr.bf16.mxu0 0
        %622 = vmatpush1.bf16.msra.mxu0 %v608
        %623 = vmatprep.subr.bf16.mxu0 0
        %624 = vmatpush1.bf16.msra.mxu0 %v609
        %625 = vmatprep.subr.bf16.mxu0 0
        %626 = vmatpush1.bf16.msra.mxu0 0
        %627 = vmatprep.subr.bf16.mxu0 0
        %628 = vmatpush1.bf16.msra.mxu0 0
        %629 = vmatprep.subr.bf16.mxu0 0
        %630 = vmatpush1.bf16.msra.mxu0 0
        %631 = vmatprep.subr.bf16.mxu0 0
        %632 = vmatpush1.bf16.msra.mxu0 0
        %633 = vmatprep.subr.bf16.mxu0 0
        %634 = vmatpush1.bf16.msra.mxu0 0
        %635 = vmatprep.subr.bf16.mxu0 0
        %636 = vmatpush1.bf16.msra.mxu0 0
        %637 = vmatprep.subr.bf16.mxu0 0
        %638 = vmatpush1.bf16.msra.mxu0 0
        %639 = vmatprep.subr.bf16.mxu0 0
        %640 = vmatpush1.bf16.msra.mxu0 0
        %641 = vmatprep.subr.bf16.mxu0 0
        %642 = vmatpush1.bf16.msra.mxu0 0
        %643 = vmatprep.subr.bf16.mxu0 0
        %644 = vmatpush1.bf16.msra.mxu0 0
        %645 = vmatprep.subr.bf16.mxu0 0
        %646 = vmatpush1.bf16.msra.mxu0 0
        %647 = vmatprep.subr.bf16.mxu0 0
        %648 = vmatpush1.bf16.msra.mxu0 0
        %649 = vmatprep.mubr.bf16.mxu0 0
        %650 = vmatmul.mubr.bf16.gmra.mrb[0].mxu0 %v615
        %v651 = vpop.f32.mrb[0].mxu0
        %v652 = vadd.f32 %v612, %v651
        %v653 = vpop.f32.mrb[0].mxu0
        %v654 = vpop.f32.mrb[0].mxu0
        %v655 = vpop.f32.mrb[0].mxu0
        %656 = vdwg.mxu0
        %657 = vst [vmem:[%s229] sm:$0x1] %v652
        %s658 = sand.u32 %s137, 1
        %s659 = scalar_lea.sflag [#allocation3], %s658
        %s660 = sand.u32 %s137, 1
        %s661 = scalar_lea.vmem [#allocation2], %s660
        // Predicated region
        $region41: #{tpu_custom_call.1} parent=39 // pred_check
          %p662 = pneg %p147
        $region42: #{tpu_custom_call.1} parent=39 // pred_check_branch
          %664 = sbr.rel (%p662) target = $region44
        $region43: #{tpu_custom_call.1} parent=39 // pred_region
          %s666 = ssub.s32 16, 16
          %667 = vsyncadd %s659, %s666
          %s668 = smul.addr %s19, 16
          %s669 = scalar_lea.hbm %s5, %s668
          %s671 = sshll.u32 %s661, 4
          %s672 = int_to_ptr.vmem [resolvable:$true] %s671
          %674 = dma.vmem_to_hbm [thread:$0]  %s672, 16, %s669, %s659
        $region44: #{tpu_custom_call.1} parent=39 // pred_fallthru
          _
      $region40: #{tpu_custom_call.1} parent=5 // pred_fallthru
        _
      %p675 = scmp.le.s32.totalorder 2, %s14
      // Predicated region
      $region45: #{tpu_custom_call.1} parent=5 // pred_check
        %p676 = pneg %p675
      $region46: #{tpu_custom_call.1} parent=5 // pred_check_branch
        %678 = sbr.rel (%p676) target = $region48
      $region47: #{tpu_custom_call.1} parent=5 // pred_region
        %s679 = ssub.s32 %s14, 2
        // Predicated region
        $region49: #{tpu_custom_call.1} parent=47 // pred_check
          %p680 = pneg %p153
        $region50: #{tpu_custom_call.1} parent=47 // pred_check_branch
          %682 = sbr.rel (%p680) target = $region52
        $region51: #{tpu_custom_call.1} parent=47 // pred_region
          %s683 = sand.u32 %s138, 1
          %s684 = scalar_lea.sflag [#allocation3], %s683
          %s685 = sand.u32 %s138, 1
          %s686 = scalar_lea.vmem [#allocation2], %s685
          %687 = dma.done %s684, 16
        $region52: #{tpu_custom_call.1} parent=47 // pred_fallthru
          _
      $region48: #{tpu_custom_call.1} parent=5 // pred_fallthru
        _
    $region6: #{tpu_custom_call.1} parent=1 // loop_footer
      %s18 = sadd.s32 1, %s14
    $region7: #{tpu_custom_call.1} parent=1 // loop_footer_branch
      %13 = sbr.rel target = $region3
    $region8: #{tpu_custom_call.1} parent=1 // loop_exit
      _
    %688 = vsyncpa [#allocation3], 1
    %s689 = scalar_lea.sflag [#allocation3], 1
    %690 = vsyncpa %s689, 1

</llo_original>
